<compile_context>
chip_gen: v5e
topology: v5e:2x2
jax: 0.10.0
libtpu: 0.0.40
codegen_flags: <defaults>
</compile_context>

<pallas_src>
import functools

import jax
import jax.numpy as jnp
from jax import lax
from jax.experimental import pallas as pl
from jax.experimental.pallas import tpu as pltpu


_VMEM_SPEC = pl.BlockSpec(memory_space=pltpu.MemorySpace.VMEM)


# ----------------------------------------------------------------------------
# Single fused kernel:
#   x_ref : (B*S1, T*C*S2)  lane-dense flattened input, f32
#   w_ref : (T*C, 1000)     conv+head folded weight (GAP mean folded in), bf16
#   b_ref : (1, 1000)       conv+head folded bias, f32
#   o_ref : (B, 1000)       f32
# ----------------------------------------------------------------------------
def _fused_forward_kernel(x_ref, w_ref, b_ref, o_ref, *, B, S1, S2, TC):
    x = x_ref[...]                                            # (B*S1, TC*S2)

    # --- S1 (row-group) reduction on the MXU: sel(B, B*S1) @ x -------------
    rows = B * S1
    row = lax.broadcasted_iota(jnp.int32, (B, rows), 1)
    base = lax.broadcasted_iota(jnp.int32, (B, rows), 0) * S1
    sel = ((row >= base) & (row < base + S1)).astype(jnp.float32)   # (B, B*S1)
    pooled = jnp.dot(sel, x, preferred_element_type=jnp.float32)    # (B, TC*S2)

    # --- S2 (lane-group) reduction on the MXU with an in-kernel one-hot R --
    i = lax.broadcasted_iota(jnp.int32, (TC * S2, TC), 0)
    j = lax.broadcasted_iota(jnp.int32, (TC * S2, TC), 1) * S2
    red = ((i >= j) & (i < j + S2)).astype(jnp.float32)             # (TC*S2, TC)
    gap = jnp.dot(pooled, red, preferred_element_type=jnp.float32)  # (B, TC)
    # (the 1/(S1*S2) GAP averaging factor is folded into w_ref)

    # --- fused conv3d + classifier head matmul (bf16 MXU operands) ----------
    logits = (
        jnp.dot(gap.astype(jnp.bfloat16), w_ref[...],
                preferred_element_type=jnp.float32)
        + b_ref[...]
    )                                                         # (B, 1000) f32

    # --- piecewise activations: affected cols are < 38 -> one vreg of work --
    head = logits[:, :128]                                    # (B, 128)
    col = lax.broadcasted_iota(jnp.int32, head.shape, 1)      # shared iota

    def masked_softmax(cur, lo, hi):
        m = (col >= lo) & (col < hi)
        xm = jnp.where(m, head, -1e30)
        mx = jnp.max(xm, axis=-1, keepdims=True)
        e = jnp.where(m, jnp.exp(xm - mx), 0.0)               # exp of masked vals only
        s = jnp.sum(e, axis=-1, keepdims=True)
        return jnp.where(m, e * pl.reciprocal(s, approx=True), cur)

    h = head
    h = masked_softmax(h, 0, 14)                                        # x[:, :14]
    h = jnp.where((col >= 15) & (col < 20), jax.nn.sigmoid(head), h)    # x[:, 15:20]
    h = jnp.where((col >= 21) & (col < 26), jnp.maximum(head, 0.0), h)  # x[:, 21:26]
    h = masked_softmax(h, 27, 38)                                       # x[:, 27:38]

    # Single write per lane region (no redundant full store + overwrite).
    o_ref[:, :128] = h
    o_ref[:, 128:] = logits[:, 128:]


def fold_params(conv_w, conv_b, head_w, head_b, S1, S2):
    """One-time offline folding: conv3d(1,1,11) -> GAP -> Linear == one matmul.

    Since the conv kernel has no spatial extent, GAP commutes with it, so the
    whole chain collapses into a single (T*C, N) weight (with the 1/(S1*S2)
    GAP mean factor folded in) plus a bias.  Runs once at init, not per call.
    """
    O, C, T = 3, 3, 11
    N = head_w.shape[1]
    wc = conv_w.reshape(O, C, T).astype(jnp.float32)                  # (O, C, T)
    hw = head_w.astype(jnp.float32)
    w_fused = jnp.einsum("oct,on->tcn", wc, hw).reshape(T * C, N)
    w_fused = (w_fused / jnp.float32(S1 * S2)).astype(jnp.bfloat16)
    b_fused = (conv_b.astype(jnp.float32) @ hw
               + head_b.astype(jnp.float32)).reshape(1, N)
    return w_fused, b_fused


@jax.jit
def module_forward(x, w_fused, b_fused):
    """x: (B, S1, T=11, C=3, S2) float32.  Returns (B, 1000) float32."""
    B, S1, T, C, S2 = x.shape
    assert C == 3 and T == 11
    N = w_fused.shape[1]

    # Free contiguous-axis merge (no transpose): fully lane-dense (32, 528).
    # x2[b*S1+s1, (t*C+c)*S2+s2] == x[b, s1, t, c, s2]
    x2 = x.astype(jnp.float32).reshape(B * S1, T * C * S2)

    kernel = functools.partial(_fused_forward_kernel, B=B, S1=S1, S2=S2, TC=T * C)

    # TODO(synk): if B/S ever scale toward real EfficientNet-B1 resolution, add
    # a leading grid axis over B (dimension_semantics=("parallel", ...)) so the
    # work shards across v7x's two TensorCores, keep the reduction axis trailing
    # ("arbitrary") with a VMEM accumulator, and budget per-step VMEM against
    # v7x's 64 MiB (set pltpu.CompilerParams(vmem_limit_bytes=...)).  At this
    # size the single un-gridded call is launch-overhead bound (~0.1 MB VMEM).
    return pl.pallas_call(
        kernel,
        out_shape=jax.ShapeDtypeStruct((B, N), jnp.float32),
        in_specs=[_VMEM_SPEC, _VMEM_SPEC, _VMEM_SPEC],
        out_specs=_VMEM_SPEC,
    )(x2, w_fused, b_fused)


def _reference_forward(x, conv_w, conv_b, head_w, head_b):
    """Pure-JAX unfused reference (per-pixel conv -> GAP -> linear -> activations)."""
    B, S1, T, C, S2 = x.shape
    xp = jnp.transpose(x, (0, 3, 4, 1, 2)).astype(jnp.float32)        # (B,C,S2,S1,T)
    conv = jnp.einsum("bcdhk,ock->bodh", xp, conv_w.reshape(3, 3, 11)) + conv_b[
        None, :, None, None
    ]
    feat = conv.reshape(B, 3, -1)
    logits = jnp.mean(feat, axis=-1) @ head_w + head_b[None, :]
    col = jnp.arange(logits.shape[1])[None, :]
    x2 = logits

    def sm(lo, hi):
        xm = jnp.where((col >= lo) & (col < hi), x2, -1e30)
        e = jnp.exp(xm - jnp.max(xm, axis=-1, keepdims=True))
        return e / jnp.sum(e, axis=-1, keepdims=True)

    out = x2
    out = jnp.where((col >= 0) & (col < 14), sm(0, 14), out)
    out = jnp.where((col >= 15) & (col < 20), jax.nn.sigmoid(x2), out)
    out = jnp.where((col >= 21) & (col < 26), jnp.maximum(x2, 0.0), out)
    out = jnp.where((col >= 27) & (col < 38), sm(27, 38), out)
    return out


if __name__ == "__main__":
    B, S1, T, C, S2 = 2, 16, 11, 3, 16

    key = jax.random.PRNGKey(0)
    k_x, k_cw, k_cb, k_hw, k_hb = jax.random.split(key, 5)

    x = jax.random.normal(k_x, (B, S1, T, C, S2), dtype=jnp.float32)
    # Conv3d(3, 3, kernel_size=(1,1,11)) parameters (deterministic synthetic init)
    conv_w = 0.1 * jax.random.normal(k_cw, (3, 3, 1, 1, 11), dtype=jnp.float32)
    conv_b = 0.1 * jax.random.normal(k_cb, (3,), dtype=jnp.float32)
    # Stand-in classifier head (3 -> 1000)
    head_w = 0.1 * jax.random.normal(k_hw, (3, 1000), dtype=jnp.float32)
    head_b = 0.1 * jax.random.normal(k_hb, (1000,), dtype=jnp.float32)

    # One-time weight folding (hoisted out of the per-forward path).
    w_fused, b_fused = fold_params(conv_w, conv_b, head_w, head_b, S1, S2)
    w_fused = jax.block_until_ready(w_fused)

    out = module_forward(x, w_fused, b_fused)
    out = jax.block_until_ready(out)

    ref = _reference_forward(x, conv_w, conv_b, head_w, head_b)
    assert out.shape == (B, 1000) and out.dtype == jnp.float32
    assert jnp.allclose(out, ref, rtol=1e-2, atol=1e-2)

    print("KERNEL_OK")
</pallas_src>

<mosaic_0001>
module attributes {stable_mosaic.version = 11 : i64} {
  func.func @_fused_forward_kernel(%arg0: memref<32x528xf32, #tpu.memory_space<vmem>>, %arg1: memref<33x1000xbf16, #tpu.memory_space<vmem>>, %arg2: memref<1x1000xf32, #tpu.memory_space<vmem>>, %arg3: memref<2x1000xf32, #tpu.memory_space<vmem>>) attributes {dimension_semantics = [], scalar_prefetch = 0 : i64, scratch_operands = 0 : i64, tpu.core_type = #tpu.core_type<tc>} {
    %c0 = arith.constant 0 : index
    %c0_0 = arith.constant 0 : index
    %0 = vector.load %arg0[%c0, %c0_0] : memref<32x528xf32, #tpu.memory_space<vmem>>, vector<32x528xf32>
    %1 = tpu.iota {dimensions = array<i32: 1>} : vector<2x32xi32>
    %2 = tpu.iota {dimensions = array<i32: 0>} : vector<2x32xi32>
    %c16_i32 = arith.constant 16 : i32
    %3 = vector.broadcast %c16_i32 : i32 to vector<2x32xi32>
    %4 = arith.muli %2, %3 : vector<2x32xi32>
    %5 = arith.cmpi sge, %1, %4 : vector<2x32xi32>
    %c16_i32_1 = arith.constant 16 : i32
    %6 = vector.broadcast %c16_i32_1 : i32 to vector<2x32xi32>
    %7 = arith.addi %4, %6 : vector<2x32xi32>
    %8 = arith.cmpi slt, %1, %7 : vector<2x32xi32>
    %9 = arith.andi %5, %8 : vector<2x32xi1>
    %10 = arith.extui %9 : vector<2x32xi1> to vector<2x32xi32>
    %11 = arith.sitofp %10 : vector<2x32xi32> to vector<2x32xf32>
    %cst = arith.constant dense<0.000000e+00> : vector<2x528xf32>
    %12 = tpu.matmul %11, %0, %cst {dimension_numbers = #tpu.dot_dimension_numbers<[1], [0], [0], [1], [0, 0, 1, 1], [], []>} : vector<2x32xf32>, vector<32x528xf32>, vector<2x528xf32> -> vector<2x528xf32>
    %13 = tpu.iota {dimensions = array<i32: 0>} : vector<528x33xi32>
    %14 = tpu.iota {dimensions = array<i32: 1>} : vector<528x33xi32>
    %c16_i32_2 = arith.constant 16 : i32
    %15 = vector.broadcast %c16_i32_2 : i32 to vector<528x33xi32>
    %16 = arith.muli %14, %15 : vector<528x33xi32>
    %17 = arith.cmpi sge, %13, %16 : vector<528x33xi32>
    %c16_i32_3 = arith.constant 16 : i32
    %18 = vector.broadcast %c16_i32_3 : i32 to vector<528x33xi32>
    %19 = arith.addi %16, %18 : vector<528x33xi32>
    %20 = arith.cmpi slt, %13, %19 : vector<528x33xi32>
    %21 = arith.andi %17, %20 : vector<528x33xi1>
    %22 = arith.extui %21 : vector<528x33xi1> to vector<528x33xi32>
    %23 = arith.sitofp %22 : vector<528x33xi32> to vector<528x33xf32>
    %cst_4 = arith.constant dense<0.000000e+00> : vector<2x33xf32>
    %24 = tpu.matmul %12, %23, %cst_4 {dimension_numbers = #tpu.dot_dimension_numbers<[1], [0], [0], [1], [0, 0, 1, 1], [], []>} : vector<2x528xf32>, vector<528x33xf32>, vector<2x33xf32> -> vector<2x33xf32>
    %25 = arith.truncf %24 : vector<2x33xf32> to vector<2x33xbf16>
    %c0_5 = arith.constant 0 : index
    %c0_6 = arith.constant 0 : index
    %26 = vector.load %arg1[%c0_5, %c0_6] : memref<33x1000xbf16, #tpu.memory_space<vmem>>, vector<33x1000xbf16>
    %cst_7 = arith.constant dense<0.000000e+00> : vector<2x1000xf32>
    %27 = tpu.matmul %25, %26, %cst_7 {dimension_numbers = #tpu.dot_dimension_numbers<[1], [0], [0], [1], [0, 0, 1, 1], [], []>} : vector<2x33xbf16>, vector<33x1000xbf16>, vector<2x1000xf32> -> vector<2x1000xf32>
    %c0_8 = arith.constant 0 : index
    %c0_9 = arith.constant 0 : index
    %28 = vector.load %arg2[%c0_8, %c0_9] : memref<1x1000xf32, #tpu.memory_space<vmem>>, vector<1x1000xf32>
    %29 = vector.broadcast %28 : vector<1x1000xf32> to vector<2x1000xf32>
    %30 = arith.addf %27, %29 : vector<2x1000xf32>
    %31 = vector.extract_strided_slice %30 {offsets = [0, 0], sizes = [2, 128], strides = [1, 1]} : vector<2x1000xf32> to vector<2x128xf32>
    %32 = tpu.iota {dimensions = array<i32: 1>} : vector<2x128xi32>
    %c0_i32 = arith.constant 0 : i32
    %33 = vector.broadcast %c0_i32 : i32 to vector<2x128xi32>
    %34 = arith.cmpi sge, %32, %33 : vector<2x128xi32>
    %c14_i32 = arith.constant 14 : i32
    %35 = vector.broadcast %c14_i32 : i32 to vector<2x128xi32>
    %36 = arith.cmpi slt, %32, %35 : vector<2x128xi32>
    %37 = arith.andi %34, %36 : vector<2x128xi1>
    %cst_10 = arith.constant -1.000000e+30 : f32
    %38 = vector.broadcast %cst_10 : f32 to vector<2x128xf32>
    %39 = arith.select %37, %31, %38 : vector<2x128xi1>, vector<2x128xf32>
    %cst_11 = arith.constant dense<0xFF800000> : vector<2xf32>
    %40 = vector.multi_reduction <maximumf>, %39, %cst_11 [1] : vector<2x128xf32> to vector<2xf32>
    %41 = vector.shape_cast %40 : vector<2xf32> to vector<2x1xf32>
    %42 = vector.broadcast %41 : vector<2x1xf32> to vector<2x128xf32>
    %43 = arith.subf %39, %42 : vector<2x128xf32>
    %44 = math.exp %43 : vector<2x128xf32>
    %cst_12 = arith.constant 0.000000e+00 : f32
    %45 = vector.broadcast %cst_12 : f32 to vector<2x128xf32>
    %46 = arith.select %37, %44, %45 : vector<2x128xi1>, vector<2x128xf32>
    %cst_13 = arith.constant dense<0.000000e+00> : vector<2xf32>
    %47 = vector.multi_reduction <add>, %46, %cst_13 [1] : vector<2x128xf32> to vector<2xf32>
    %48 = vector.shape_cast %47 : vector<2xf32> to vector<2x1xf32>
    %49 = tpu.reciprocal %48 {approx = true} : vector<2x1xf32> -> vector<2x1xf32>
    %50 = vector.broadcast %49 : vector<2x1xf32> to vector<2x128xf32>
    %51 = arith.mulf %46, %50 : vector<2x128xf32>
    %52 = arith.select %37, %51, %31 : vector<2x128xi1>, vector<2x128xf32>
    %c15_i32 = arith.constant 15 : i32
    %53 = vector.broadcast %c15_i32 : i32 to vector<2x128xi32>
    %54 = arith.cmpi sge, %32, %53 : vector<2x128xi32>
    %c20_i32 = arith.constant 20 : i32
    %55 = vector.broadcast %c20_i32 : i32 to vector<2x128xi32>
    %56 = arith.cmpi slt, %32, %55 : vector<2x128xi32>
    %57 = arith.andi %54, %56 : vector<2x128xi1>
    %58 = arith.negf %31 : vector<2x128xf32>
    %59 = math.exp %58 : vector<2x128xf32>
    %cst_14 = arith.constant 1.000000e+00 : f32
    %60 = vector.broadcast %cst_14 : f32 to vector<2x128xf32>
    %61 = arith.addf %60, %59 : vector<2x128xf32>
    %62 = arith.divf %60, %61 : vector<2x128xf32>
    %63 = arith.select %57, %62, %52 : vector<2x128xi1>, vector<2x128xf32>
    %c21_i32 = arith.constant 21 : i32
    %64 = vector.broadcast %c21_i32 : i32 to vector<2x128xi32>
    %65 = arith.cmpi sge, %32, %64 : vector<2x128xi32>
    %c26_i32 = arith.constant 26 : i32
    %66 = vector.broadcast %c26_i32 : i32 to vector<2x128xi32>
    %67 = arith.cmpi slt, %32, %66 : vector<2x128xi32>
    %68 = arith.andi %65, %67 : vector<2x128xi1>
    %cst_15 = arith.constant 0.000000e+00 : f32
    %69 = vector.broadcast %cst_15 : f32 to vector<2x128xf32>
    %70 = arith.maximumf %31, %69 : vector<2x128xf32>
    %71 = arith.select %68, %70, %63 : vector<2x128xi1>, vector<2x128xf32>
    %c27_i32 = arith.constant 27 : i32
    %72 = vector.broadcast %c27_i32 : i32 to vector<2x128xi32>
    %73 = arith.cmpi sge, %32, %72 : vector<2x128xi32>
    %c38_i32 = arith.constant 38 : i32
    %74 = vector.broadcast %c38_i32 : i32 to vector<2x128xi32>
    %75 = arith.cmpi slt, %32, %74 : vector<2x128xi32>
    %76 = arith.andi %73, %75 : vector<2x128xi1>
    %cst_16 = arith.constant -1.000000e+30 : f32
    %77 = vector.broadcast %cst_16 : f32 to vector<2x128xf32>
    %78 = arith.select %76, %31, %77 : vector<2x128xi1>, vector<2x128xf32>
    %cst_17 = arith.constant dense<0xFF800000> : vector<2xf32>
    %79 = vector.multi_reduction <maximumf>, %78, %cst_17 [1] : vector<2x128xf32> to vector<2xf32>
    %80 = vector.shape_cast %79 : vector<2xf32> to vector<2x1xf32>
    %81 = vector.broadcast %80 : vector<2x1xf32> to vector<2x128xf32>
    %82 = arith.subf %78, %81 : vector<2x128xf32>
    %83 = math.exp %82 : vector<2x128xf32>
    %cst_18 = arith.constant 0.000000e+00 : f32
    %84 = vector.broadcast %cst_18 : f32 to vector<2x128xf32>
    %85 = arith.select %76, %83, %84 : vector<2x128xi1>, vector<2x128xf32>
    %cst_19 = arith.constant dense<0.000000e+00> : vector<2xf32>
    %86 = vector.multi_reduction <add>, %85, %cst_19 [1] : vector<2x128xf32> to vector<2xf32>
    %87 = vector.shape_cast %86 : vector<2xf32> to vector<2x1xf32>
    %88 = tpu.reciprocal %87 {approx = true} : vector<2x1xf32> -> vector<2x1xf32>
    %89 = vector.broadcast %88 : vector<2x1xf32> to vector<2x128xf32>
    %90 = arith.mulf %85, %89 : vector<2x128xf32>
    %91 = arith.select %76, %90, %71 : vector<2x128xi1>, vector<2x128xf32>
    %c0_20 = arith.constant 0 : index
    %c0_21 = arith.constant 0 : index
    %92 = vector.load %arg3[%c0_20, %c0_21] : memref<2x1000xf32, #tpu.memory_space<vmem>>, vector<2x128xf32>
    tpu.vector_store %arg3[%c0_20, %c0_21], %91 {strides = array<i32>} : memref<2x1000xf32, #tpu.memory_space<vmem>>, vector<2x128xf32>,
    %93 = vector.extract_strided_slice %30 {offsets = [0, 128], sizes = [2, 872], strides = [1, 1]} : vector<2x1000xf32> to vector<2x872xf32>
    %c0_22 = arith.constant 0 : index
    %c128 = arith.constant 128 : index
    %94 = vector.load %arg3[%c0_22, %c128] : memref<2x1000xf32, #tpu.memory_space<vmem>>, vector<2x872xf32>
    tpu.vector_store %arg3[%c0_22, %c128], %93 {strides = array<i32>} : memref<2x1000xf32, #tpu.memory_space<vmem>>, vector<2x872xf32>,
    return
  }
}

</mosaic_0001>

<llo_original>
// kernel: module_forward.1
$region0: #{module_forward.1}
  #allocation0 [shape = 'u32[]', space=smem, size = 0x4, offset = 0x4, fixed_abs, tag = 'smem constant byte address 0x4 - core index']
  #allocation1 [shape = 'u32[72,128]{1,0:T(1,128)}', space=vmem, size = 0x9000, scoped, tag = 'internal scratch']
  %s0 = inlined_call_operand.vmem [shape: f32[32,528], index: 0, kind: input, shape index: {}]
  %s1 = inlined_call_operand.vmem [shape: bf16[33,1000], index: 1, kind: input, shape index: {}]
  %s2 = inlined_call_operand.vmem [shape: f32[1,1000], index: 2, kind: input, shape index: {}]
  %s3 = inlined_call_operand.hbm [shape: f32[2,1000], index: 3, kind: output, shape index: {}]
  %s4 = sld [smem:[#allocation0]]
  $region22: #{module_forward.1} parent=0
    _
  %s6 = ssub.s32 1, %s4
  %s7 = scalar_select 0, %s6, %s4
  $region1: #{module_forward.1} parent=0
    #allocation2 [shape = 'u8[8192]{0}', space=vmem, size = 0x2000, scoped, tag = 'output window, operand 0, single buffered']
    #allocation3 [shape = 's32[1]{0}', space=sflag, size = 0x4, scoped, tag = 'scoped memory for module_forward.1']
    %8 = vsyncpa [#allocation3], 0
    // Predicated region
    $region2: #{module_forward.1} parent=1 // pred_check
      _
    $region3: #{module_forward.1} parent=1 // pred_check_branch
      %10 = sbr.rel (0) target = $region5
    $region4: #{module_forward.1} parent=1 // pred_region
      _
    $region5: #{module_forward.1} parent=1 // pred_fallthru
      _
    // Predicated region
    $region6: #{module_forward.1} parent=1 // pred_check
      _
    $region7: #{module_forward.1} parent=1 // pred_check_branch
      %12 = sbr.rel (0) target = $region9
    $region8: #{module_forward.1} parent=1 // pred_region
      _
    $region9: #{module_forward.1} parent=1 // pred_fallthru
      _
    // Predicated region
    $region10: #{module_forward.1} parent=1 // pred_check
      _
    $region11: #{module_forward.1} parent=1 // pred_check_branch
      %14 = sbr.rel (0) target = $region13
    $region12: #{module_forward.1} parent=1 // pred_region
      _
    $region13: #{module_forward.1} parent=1 // pred_fallthru
      _
    %v16 = vld [vmem:[%s0] sm:$0xff]
    %v17 = vld [vmem:[%s0 + $0x8] sm:$0xff]
    %v18 = vld [vmem:[%s0 + $0x10] sm:$0xff]
    %v19 = vld [vmem:[%s0 + $0x18] sm:$0xff]
    %v20 = vld [vmem:[%s0 + $0x20] sm:$0xff]
    %v21 = vld [vmem:[%s0 + $0x28] sm:$0xff]
    %v22 = vld [vmem:[%s0 + $0x30] sm:$0xff]
    %v23 = vld [vmem:[%s0 + $0x38] sm:$0xff]
    %v24 = vld [vmem:[%s0 + $0x40] sm:$0xff]
    %v25 = vld [vmem:[%s0 + $0x48] sm:$0xff]
    %v26 = vld [vmem:[%s0 + $0x50] sm:$0xff]
    %v27 = vld [vmem:[%s0 + $0x58] sm:$0xff]
    %v28 = vld [vmem:[%s0 + $0x60] sm:$0xff]
    %v29 = vld [vmem:[%s0 + $0x68] sm:$0xff]
    %v30 = vld [vmem:[%s0 + $0x70] sm:$0xff]
    %v31 = vld [vmem:[%s0 + $0x78] sm:$0xff]
    %v32 = vld [vmem:[%s0 + $0x80] sm:$0xff]
    %v33 = vld [vmem:[%s0 + $0x88] sm:$0xff]
    %v34 = vld [vmem:[%s0 + $0x90] sm:$0xff]
    %v35 = vld [vmem:[%s0 + $0x98] sm:$0xff]
    %v36 = vlaneseq
    %v37 = vand.u32 %v36, 127
    %v38 = vlaneseq
    %v39 = vshrl.u32 %v38, 7
    %v40 = vmul.u32 %v39, 16
    %vm41 = vcmp.ge.s32.totalorder %v37, %v40
    %v42 = vadd.s32 %v40, 16
    %vm43 = vcmp.lt.s32.totalorder %v37, %v42
    %vm44 = vmand %vm41, %vm43
    %v45 = vsel %vm44, 1, 0
    %v46 = vcvt.s32.f32 %v45
    %vm47 = vcmask 261120
    %v49 = vsel %vm47, %v46, 0
    %51 = vmatpush.msra.mxu0 0.0
    %52 = vmatpush.msra.mxu0 0.0
    %53 = vmatpush.msra.mxu0 0.0
    %54 = vmatpush.msra.mxu0 0.0
    %55 = vmatpush.msra.mxu0 0.0
    %56 = vmatpush.msra.mxu0 0.0
    %57 = vmatpush.msra.mxu0 0.0
    %58 = vmatpush.msra.mxu0 0.0
    %59 = vmatpush.msra.mxu0 0.0
    %60 = vmatpush.msra.mxu0 0.0
    %61 = vmatpush.msra.mxu0 0.0
    %62 = vmatpush.msra.mxu0 0.0
    %63 = vmatpush.msra.mxu0 %v31
    %64 = vmatpush.msra.mxu0 %v26
    %65 = vmatpush.msra.mxu0 %v21
    %66 = vmatpush.msra.mxu0 %v16
    %67 = vmatmul.f32.gmra.mxu0 %v49
    %v68 = vpop.f32.mrf.mxu0
    %v69 = vadd.f32 0.0, %v68
    %70 = vdwg.mxu0
    %71 = vmatpush.msra.mxu0 0.0
    %72 = vmatpush.msra.mxu0 0.0
    %73 = vmatpush.msra.mxu0 0.0
    %74 = vmatpush.msra.mxu0 0.0
    %75 = vmatpush.msra.mxu0 0.0
    %76 = vmatpush.msra.mxu0 0.0
    %77 = vmatpush.msra.mxu0 0.0
    %78 = vmatpush.msra.mxu0 0.0
    %79 = vmatpush.msra.mxu0 0.0
    %80 = vmatpush.msra.mxu0 0.0
    %81 = vmatpush.msra.mxu0 0.0
    %82 = vmatpush.msra.mxu0 0.0
    %83 = vmatpush.msra.mxu0 %v32
    %84 = vmatpush.msra.mxu0 %v27
    %85 = vmatpush.msra.mxu0 %v22
    %86 = vmatpush.msra.mxu0 %v17
    %87 = vmatmul.f32.gmra.mxu0 %v49
    %v88 = vpop.f32.mrf.mxu0
    %v89 = vadd.f32 0.0, %v88
    %90 = vdwg.mxu0
    %91 = vmatpush.msra.mxu0 0.0
    %92 = vmatpush.msra.mxu0 0.0
    %93 = vmatpush.msra.mxu0 0.0
    %94 = vmatpush.msra.mxu0 0.0
    %95 = vmatpush.msra.mxu0 0.0
    %96 = vmatpush.msra.mxu0 0.0
    %97 = vmatpush.msra.mxu0 0.0
    %98 = vmatpush.msra.mxu0 0.0
    %99 = vmatpush.msra.mxu0 0.0
    %100 = vmatpush.msra.mxu0 0.0
    %101 = vmatpush.msra.mxu0 0.0
    %102 = vmatpush.msra.mxu0 0.0
    %103 = vmatpush.msra.mxu0 %v33
    %104 = vmatpush.msra.mxu0 %v28
    %105 = vmatpush.msra.mxu0 %v23
    %106 = vmatpush.msra.mxu0 %v18
    %107 = vmatmul.f32.gmra.mxu0 %v49
    %v108 = vpop.f32.mrf.mxu0
    %v109 = vadd.f32 0.0, %v108
    %110 = vdwg.mxu0
    %111 = vmatpush.msra.mxu0 0.0
    %112 = vmatpush.msra.mxu0 0.0
    %113 = vmatpush.msra.mxu0 0.0
    %114 = vmatpush.msra.mxu0 0.0
    %115 = vmatpush.msra.mxu0 0.0
    %116 = vmatpush.msra.mxu0 0.0
    %117 = vmatpush.msra.mxu0 0.0
    %118 = vmatpush.msra.mxu0 0.0
    %119 = vmatpush.msra.mxu0 0.0
    %120 = vmatpush.msra.mxu0 0.0
    %121 = vmatpush.msra.mxu0 0.0
    %122 = vmatpush.msra.mxu0 0.0
    %123 = vmatpush.msra.mxu0 %v34
    %124 = vmatpush.msra.mxu0 %v29
    %125 = vmatpush.msra.mxu0 %v24
    %126 = vmatpush.msra.mxu0 %v19
    %127 = vmatmul.f32.gmra.mxu0 %v49
    %v128 = vpop.f32.mrf.mxu0
    %v129 = vadd.f32 0.0, %v128
    %130 = vdwg.mxu0
    %131 = vmatpush.msra.mxu0 0.0
    %132 = vmatpush.msra.mxu0 0.0
    %133 = vmatpush.msra.mxu0 0.0
    %134 = vmatpush.msra.mxu0 0.0
    %135 = vmatpush.msra.mxu0 0.0
    %136 = vmatpush.msra.mxu0 0.0
    %137 = vmatpush.msra.mxu0 0.0
    %138 = vmatpush.msra.mxu0 0.0
    %139 = vmatpush.msra.mxu0 0.0
    %140 = vmatpush.msra.mxu0 0.0
    %141 = vmatpush.msra.mxu0 0.0
    %142 = vmatpush.msra.mxu0 0.0
    %143 = vmatpush.msra.mxu0 %v35
    %144 = vmatpush.msra.mxu0 %v30
    %145 = vmatpush.msra.mxu0 %v25
    %146 = vmatpush.msra.mxu0 %v20
    %147 = vmatmul.f32.gmra.mxu0 %v49
    %v148 = vpop.f32.mrf.mxu0
    %v149 = vadd.f32 0.0, %v148
    %150 = vdwg.mxu0
    %v151 = vadd.s32 %v39, 8
    %v152 = vadd.s32 %v39, 16
    %v153 = vadd.s32 %v39, 24
    %v154 = vadd.s32 %v39, 32
    %v155 = vadd.s32 %v39, 40
    %v156 = vadd.s32 %v39, 48
    %v157 = vadd.s32 %v39, 56
    %v158 = vadd.s32 %v39, 64
    %v159 = vadd.s32 %v39, 72
    %v160 = vadd.s32 %v39, 80
    %v161 = vadd.s32 %v39, 88
    %v162 = vadd.s32 %v39, 96
    %v163 = vadd.s32 %v39, 104
    %v164 = vadd.s32 %v39, 112
    %v165 = vadd.s32 %v39, 120
    %v166 = vadd.s32 %v39, 128
    %v167 = vadd.s32 %v39, 136
    %v168 = vadd.s32 %v39, 144
    %v169 = vadd.s32 %v39, 152
    %v170 = vadd.s32 %v39, 160
    %v171 = vadd.s32 %v39, 168
    %v172 = vadd.s32 %v39, 176
    %v173 = vadd.s32 %v39, 184
    %v174 = vadd.s32 %v39, 192
    %v175 = vadd.s32 %v39, 200
    %v176 = vadd.s32 %v39, 208
    %v177 = vadd.s32 %v39, 216
    %v178 = vadd.s32 %v39, 224
    %v179 = vadd.s32 %v39, 232
    %v180 = vadd.s32 %v39, 240
    %v181 = vadd.s32 %v39, 248
    %v182 = vadd.s32 %v39, 256
    %v183 = vadd.s32 %v39, 264
    %v184 = vadd.s32 %v39, 272
    %v185 = vadd.s32 %v39, 280
    %v186 = vadd.s32 %v39, 288
    %v187 = vadd.s32 %v39, 296
    %v188 = vadd.s32 %v39, 304
    %v189 = vadd.s32 %v39, 312
    %v190 = vadd.s32 %v39, 320
    %v191 = vadd.s32 %v39, 328
    %v192 = vadd.s32 %v39, 336
    %v193 = vadd.s32 %v39, 344
    %v194 = vadd.s32 %v39, 352
    %v195 = vadd.s32 %v39, 360
    %v196 = vadd.s32 %v39, 368
    %v197 = vadd.s32 %v39, 376
    %v198 = vadd.s32 %v39, 384
    %v199 = vadd.s32 %v39, 392
    %v200 = vadd.s32 %v39, 400
    %v201 = vadd.s32 %v39, 408
    %v202 = vadd.s32 %v39, 416
    %v203 = vadd.s32 %v39, 424
    %v204 = vadd.s32 %v39, 432
    %v205 = vadd.s32 %v39, 440
    %v206 = vadd.s32 %v39, 448
    %v207 = vadd.s32 %v39, 456
    %v208 = vadd.s32 %v39, 464
    %v209 = vadd.s32 %v39, 472
    %v210 = vadd.s32 %v39, 480
    %v211 = vadd.s32 %v39, 488
    %v212 = vadd.s32 %v39, 496
    %v213 = vadd.s32 %v39, 504
    %v214 = vadd.s32 %v39, 512
    %v215 = vadd.s32 %v39, 520
    %v216 = vmul.u32 %v37, 16
    %vm217 = vcmp.ge.s32.totalorder %v39, %v216
    %vm218 = vcmp.ge.s32.totalorder %v151, %v216
    %vm219 = vcmp.ge.s32.totalorder %v152, %v216
    %vm220 = vcmp.ge.s32.totalorder %v153, %v216
    %vm221 = vcmp.ge.s32.totalorder %v154, %v216
    %vm222 = vcmp.ge.s32.totalorder %v155, %v216
    %vm223 = vcmp.ge.s32.totalorder %v156, %v216
    %vm224 = vcmp.ge.s32.totalorder %v157, %v216
    %vm225 = vcmp.ge.s32.totalorder %v158, %v216
    %vm226 = vcmp.ge.s32.totalorder %v159, %v216
    %vm227 = vcmp.ge.s32.totalorder %v160, %v216
    %vm228 = vcmp.ge.s32.totalorder %v161, %v216
    %vm229 = vcmp.ge.s32.totalorder %v162, %v216
    %vm230 = vcmp.ge.s32.totalorder %v163, %v216
    %vm231 = vcmp.ge.s32.totalorder %v164, %v216
    %vm232 = vcmp.ge.s32.totalorder %v165, %v216
    %vm233 = vcmp.ge.s32.totalorder %v166, %v216
    %vm234 = vcmp.ge.s32.totalorder %v167, %v216
    %vm235 = vcmp.ge.s32.totalorder %v168, %v216
    %vm236 = vcmp.ge.s32.totalorder %v169, %v216
    %vm237 = vcmp.ge.s32.totalorder %v170, %v216
    %vm238 = vcmp.ge.s32.totalorder %v171, %v216
    %vm239 = vcmp.ge.s32.totalorder %v172, %v216
    %vm240 = vcmp.ge.s32.totalorder %v173, %v216
    %vm241 = vcmp.ge.s32.totalorder %v174, %v216
    %vm242 = vcmp.ge.s32.totalorder %v175, %v216
    %vm243 = vcmp.ge.s32.totalorder %v176, %v216
    %vm244 = vcmp.ge.s32.totalorder %v177, %v216
    %vm245 = vcmp.ge.s32.totalorder %v178, %v216
    %vm246 = vcmp.ge.s32.totalorder %v179, %v216
    %vm247 = vcmp.ge.s32.totalorder %v180, %v216
    %vm248 = vcmp.ge.s32.totalorder %v181, %v216
    %vm249 = vcmp.ge.s32.totalorder %v182, %v216
    %vm250 = vcmp.ge.s32.totalorder %v183, %v216
    %vm251 = vcmp.ge.s32.totalorder %v184, %v216
    %vm252 = vcmp.ge.s32.totalorder %v185, %v216
    %vm253 = vcmp.ge.s32.totalorder %v186, %v216
    %vm254 = vcmp.ge.s32.totalorder %v187, %v216
    %vm255 = vcmp.ge.s32.totalorder %v188, %v216
    %vm256 = vcmp.ge.s32.totalorder %v189, %v216
    %vm257 = vcmp.ge.s32.totalorder %v190, %v216
    %vm258 = vcmp.ge.s32.totalorder %v191, %v216
    %vm259 = vcmp.ge.s32.totalorder %v192, %v216
    %vm260 = vcmp.ge.s32.totalorder %v193, %v216
    %vm261 = vcmp.ge.s32.totalorder %v194, %v216
    %vm262 = vcmp.ge.s32.totalorder %v195, %v216
    %vm263 = vcmp.ge.s32.totalorder %v196, %v216
    %vm264 = vcmp.ge.s32.totalorder %v197, %v216
    %vm265 = vcmp.ge.s32.totalorder %v198, %v216
    %vm266 = vcmp.ge.s32.totalorder %v199, %v216
    %vm267 = vcmp.ge.s32.totalorder %v200, %v216
    %vm268 = vcmp.ge.s32.totalorder %v201, %v216
    %vm269 = vcmp.ge.s32.totalorder %v202, %v216
    %vm270 = vcmp.ge.s32.totalorder %v203, %v216
    %vm271 = vcmp.ge.s32.totalorder %v204, %v216
    %vm272 = vcmp.ge.s32.totalorder %v205, %v216
    %vm273 = vcmp.ge.s32.totalorder %v206, %v216
    %vm274 = vcmp.ge.s32.totalorder %v207, %v216
    %vm275 = vcmp.ge.s32.totalorder %v208, %v216
    %vm276 = vcmp.ge.s32.totalorder %v209, %v216
    %vm277 = vcmp.ge.s32.totalorder %v210, %v216
    %vm278 = vcmp.ge.s32.totalorder %v211, %v216
    %vm279 = vcmp.ge.s32.totalorder %v212, %v216
    %vm280 = vcmp.ge.s32.totalorder %v213, %v216
    %vm281 = vcmp.ge.s32.totalorder %v214, %v216
    %vm282 = vcmp.ge.s32.totalorder %v215, %v216
    %v283 = vadd.s32 %v216, 16
    %vm284 = vcmp.lt.s32.totalorder %v39, %v283
    %vm285 = vcmp.lt.s32.totalorder %v151, %v283
    %vm286 = vcmp.lt.s32.totalorder %v152, %v283
    %vm287 = vcmp.lt.s32.totalorder %v153, %v283
    %vm288 = vcmp.lt.s32.totalorder %v154, %v283
    %vm289 = vcmp.lt.s32.totalorder %v155, %v283
    %vm290 = vcmp.lt.s32.totalorder %v156, %v283
    %vm291 = vcmp.lt.s32.totalorder %v157, %v283
    %vm292 = vcmp.lt.s32.totalorder %v158, %v283
    %vm293 = vcmp.lt.s32.totalorder %v159, %v283
    %vm294 = vcmp.lt.s32.totalorder %v160, %v283
    %vm295 = vcmp.lt.s32.totalorder %v161, %v283
    %vm296 = vcmp.lt.s32.totalorder %v162, %v283
    %vm297 = vcmp.lt.s32.totalorder %v163, %v283
    %vm298 = vcmp.lt.s32.totalorder %v164, %v283
    %vm299 = vcmp.lt.s32.totalorder %v165, %v283
    %vm300 = vcmp.lt.s32.totalorder %v166, %v283
    %vm301 = vcmp.lt.s32.totalorder %v167, %v283
    %vm302 = vcmp.lt.s32.totalorder %v168, %v283
    %vm303 = vcmp.lt.s32.totalorder %v169, %v283
    %vm304 = vcmp.lt.s32.totalorder %v170, %v283
    %vm305 = vcmp.lt.s32.totalorder %v171, %v283
    %vm306 = vcmp.lt.s32.totalorder %v172, %v283
    %vm307 = vcmp.lt.s32.totalorder %v173, %v283
    %vm308 = vcmp.lt.s32.totalorder %v174, %v283
    %vm309 = vcmp.lt.s32.totalorder %v175, %v283
    %vm310 = vcmp.lt.s32.totalorder %v176, %v283
    %vm311 = vcmp.lt.s32.totalorder %v177, %v283
    %vm312 = vcmp.lt.s32.totalorder %v178, %v283
    %vm313 = vcmp.lt.s32.totalorder %v179, %v283
    %vm314 = vcmp.lt.s32.totalorder %v180, %v283
    %vm315 = vcmp.lt.s32.totalorder %v181, %v283
    %vm316 = vcmp.lt.s32.totalorder %v182, %v283
    %vm317 = vcmp.lt.s32.totalorder %v183, %v283
    %vm318 = vcmp.lt.s32.totalorder %v184, %v283
    %vm319 = vcmp.lt.s32.totalorder %v185, %v283
    %vm320 = vcmp.lt.s32.totalorder %v186, %v283
    %vm321 = vcmp.lt.s32.totalorder %v187, %v283
    %vm322 = vcmp.lt.s32.totalorder %v188, %v283
    %vm323 = vcmp.lt.s32.totalorder %v189, %v283
    %vm324 = vcmp.lt.s32.totalorder %v190, %v283
    %vm325 = vcmp.lt.s32.totalorder %v191, %v283
    %vm326 = vcmp.lt.s32.totalorder %v192, %v283
    %vm327 = vcmp.lt.s32.totalorder %v193, %v283
    %vm328 = vcmp.lt.s32.totalorder %v194, %v283
    %vm329 = vcmp.lt.s32.totalorder %v195, %v283
    %vm330 = vcmp.lt.s32.totalorder %v196, %v283
    %vm331 = vcmp.lt.s32.totalorder %v197, %v283
    %vm332 = vcmp.lt.s32.totalorder %v198, %v283
    %vm333 = vcmp.lt.s32.totalorder %v199, %v283
    %vm334 = vcmp.lt.s32.totalorder %v200, %v283
    %vm335 = vcmp.lt.s32.totalorder %v201, %v283
    %vm336 = vcmp.lt.s32.totalorder %v202, %v283
    %vm337 = vcmp.lt.s32.totalorder %v203, %v283
    %vm338 = vcmp.lt.s32.totalorder %v204, %v283
    %vm339 = vcmp.lt.s32.totalorder %v205, %v283
    %vm340 = vcmp.lt.s32.totalorder %v206, %v283
    %vm341 = vcmp.lt.s32.totalorder %v207, %v283
    %vm342 = vcmp.lt.s32.totalorder %v208, %v283
    %vm343 = vcmp.lt.s32.totalorder %v209, %v283
    %vm344 = vcmp.lt.s32.totalorder %v210, %v283
    %vm345 = vcmp.lt.s32.totalorder %v211, %v283
    %vm346 = vcmp.lt.s32.totalorder %v212, %v283
    %vm347 = vcmp.lt.s32.totalorder %v213, %v283
    %vm348 = vcmp.lt.s32.totalorder %v214, %v283
    %vm349 = vcmp.lt.s32.totalorder %v215, %v283
    %vm350 = vmand %vm217, %vm284
    %vm351 = vmand %vm218, %vm285
    %vm352 = vmand %vm219, %vm286
    %vm353 = vmand %vm220, %vm287
    %vm354 = vmand %vm221, %vm288
    %vm355 = vmand %vm222, %vm289
    %vm356 = vmand %vm223, %vm290
    %vm357 = vmand %vm224, %vm291
    %vm358 = vmand %vm225, %vm292
    %vm359 = vmand %vm226, %vm293
    %vm360 = vmand %vm227, %vm294
    %vm361 = vmand %vm228, %vm295
    %vm362 = vmand %vm229, %vm296
    %vm363 = vmand %vm230, %vm297
    %vm364 = vmand %vm231, %vm298
    %vm365 = vmand %vm232, %vm299
    %vm366 = vmand %vm233, %vm300
    %vm367 = vmand %vm234, %vm301
    %vm368 = vmand %vm235, %vm302
    %vm369 = vmand %vm236, %vm303
    %vm370 = vmand %vm237, %vm304
    %vm371 = vmand %vm238, %vm305
    %vm372 = vmand %vm239, %vm306
    %vm373 = vmand %vm240, %vm307
    %vm374 = vmand %vm241, %vm308
    %vm375 = vmand %vm242, %vm309
    %vm376 = vmand %vm243, %vm310
    %vm377 = vmand %vm244, %vm311
    %vm378 = vmand %vm245, %vm312
    %vm379 = vmand %vm246, %vm313
    %vm380 = vmand %vm247, %vm314
    %vm381 = vmand %vm248, %vm315
    %vm382 = vmand %vm249, %vm316
    %vm383 = vmand %vm250, %vm317
    %vm384 = vmand %vm251, %vm318
    %vm385 = vmand %vm252, %vm319
    %vm386 = vmand %vm253, %vm320
    %vm387 = vmand %vm254, %vm321
    %vm388 = vmand %vm255, %vm322
    %vm389 = vmand %vm256, %vm323
    %vm390 = vmand %vm257, %vm324
    %vm391 = vmand %vm258, %vm325
    %vm392 = vmand %vm259, %vm326
    %vm393 = vmand %vm260, %vm327
    %vm394 = vmand %vm261, %vm328
    %vm395 = vmand %vm262, %vm329
    %vm396 = vmand %vm263, %vm330
    %vm397 = vmand %vm264, %vm331
    %vm398 = vmand %vm265, %vm332
    %vm399 = vmand %vm266, %vm333
    %vm400 = vmand %vm267, %vm334
    %vm401 = vmand %vm268, %vm335
    %vm402 = vmand %vm269, %vm336
    %vm403 = vmand %vm270, %vm337
    %vm404 = vmand %vm271, %vm338
    %vm405 = vmand %vm272, %vm339
    %vm406 = vmand %vm273, %vm340
    %vm407 = vmand %vm274, %vm341
    %vm408 = vmand %vm275, %vm342
    %vm409 = vmand %vm276, %vm343
    %vm410 = vmand %vm277, %vm344
    %vm411 = vmand %vm278, %vm345
    %vm412 = vmand %vm279, %vm346
    %vm413 = vmand %vm280, %vm347
    %vm414 = vmand %vm281, %vm348
    %vm415 = vmand %vm282, %vm349
    %v416 = vsel %vm350, 1, 0
    %v417 = vsel %vm351, 1, 0
    %v418 = vsel %vm352, 1, 0
    %v419 = vsel %vm353, 1, 0
    %v420 = vsel %vm354, 1, 0
    %v421 = vsel %vm355, 1, 0
    %v422 = vsel %vm356, 1, 0
    %v423 = vsel %vm357, 1, 0
    %v424 = vsel %vm358, 1, 0
    %v425 = vsel %vm359, 1, 0
    %v426 = vsel %vm360, 1, 0
    %v427 = vsel %vm361, 1, 0
    %v428 = vsel %vm362, 1, 0
    %v429 = vsel %vm363, 1, 0
    %v430 = vsel %vm364, 1, 0
    %v431 = vsel %vm365, 1, 0
    %v432 = vsel %vm366, 1, 0
    %v433 = vsel %vm367, 1, 0
    %v434 = vsel %vm368, 1, 0
    %v435 = vsel %vm369, 1, 0
    %v436 = vsel %vm370, 1, 0
    %v437 = vsel %vm371, 1, 0
    %v438 = vsel %vm372, 1, 0
    %v439 = vsel %vm373, 1, 0
    %v440 = vsel %vm374, 1, 0
    %v441 = vsel %vm375, 1, 0
    %v442 = vsel %vm376, 1, 0
    %v443 = vsel %vm377, 1, 0
    %v444 = vsel %vm378, 1, 0
    %v445 = vsel %vm379, 1, 0
    %v446 = vsel %vm380, 1, 0
    %v447 = vsel %vm381, 1, 0
    %v448 = vsel %vm382, 1, 0
    %v449 = vsel %vm383, 1, 0
    %v450 = vsel %vm384, 1, 0
    %v451 = vsel %vm385, 1, 0
    %v452 = vsel %vm386, 1, 0
    %v453 = vsel %vm387, 1, 0
    %v454 = vsel %vm388, 1, 0
    %v455 = vsel %vm389, 1, 0
    %v456 = vsel %vm390, 1, 0
    %v457 = vsel %vm391, 1, 0
    %v458 = vsel %vm392, 1, 0
    %v459 = vsel %vm393, 1, 0
    %v460 = vsel %vm394, 1, 0
    %v461 = vsel %vm395, 1, 0
    %v462 = vsel %vm396, 1, 0
    %v463 = vsel %vm397, 1, 0
    %v464 = vsel %vm398, 1, 0
    %v465 = vsel %vm399, 1, 0
    %v466 = vsel %vm400, 1, 0
    %v467 = vsel %vm401, 1, 0
    %v468 = vsel %vm402, 1, 0
    %v469 = vsel %vm403, 1, 0
    %v470 = vsel %vm404, 1, 0
    %v471 = vsel %vm405, 1, 0
    %v472 = vsel %vm406, 1, 0
    %v473 = vsel %vm407, 1, 0
    %v474 = vsel %vm408, 1, 0
    %v475 = vsel %vm409, 1, 0
    %v476 = vsel %vm410, 1, 0
    %v477 = vsel %vm411, 1, 0
    %v478 = vsel %vm412, 1, 0
    %v479 = vsel %vm413, 1, 0
    %v480 = vsel %vm414, 1, 0
    %v481 = vsel %vm415, 1, 0
    %v482 = vcvt.s32.f32 %v416
    %v483 = vcvt.s32.f32 %v417
    %v484 = vcvt.s32.f32 %v418
    %v485 = vcvt.s32.f32 %v419
    %v486 = vcvt.s32.f32 %v420
    %v487 = vcvt.s32.f32 %v421
    %v488 = vcvt.s32.f32 %v422
    %v489 = vcvt.s32.f32 %v423
    %v490 = vcvt.s32.f32 %v424
    %v491 = vcvt.s32.f32 %v425
    %v492 = vcvt.s32.f32 %v426
    %v493 = vcvt.s32.f32 %v427
    %v494 = vcvt.s32.f32 %v428
    %v495 = vcvt.s32.f32 %v429
    %v496 = vcvt.s32.f32 %v430
    %v497 = vcvt.s32.f32 %v431
    %v498 = vcvt.s32.f32 %v432
    %v499 = vcvt.s32.f32 %v433
    %v500 = vcvt.s32.f32 %v434
    %v501 = vcvt.s32.f32 %v435
    %v502 = vcvt.s32.f32 %v436
    %v503 = vcvt.s32.f32 %v437
    %v504 = vcvt.s32.f32 %v438
    %v505 = vcvt.s32.f32 %v439
    %v506 = vcvt.s32.f32 %v440
    %v507 = vcvt.s32.f32 %v441
    %v508 = vcvt.s32.f32 %v442
    %v509 = vcvt.s32.f32 %v443
    %v510 = vcvt.s32.f32 %v444
    %v511 = vcvt.s32.f32 %v445
    %v512 = vcvt.s32.f32 %v446
    %v513 = vcvt.s32.f32 %v447
    %v514 = vcvt.s32.f32 %v448
    %v515 = vcvt.s32.f32 %v449
    %v516 = vcvt.s32.f32 %v450
    %v517 = vcvt.s32.f32 %v451
    %v518 = vcvt.s32.f32 %v452
    %v519 = vcvt.s32.f32 %v453
    %v520 = vcvt.s32.f32 %v454
    %v521 = vcvt.s32.f32 %v455
    %v522 = vcvt.s32.f32 %v456
    %v523 = vcvt.s32.f32 %v457
    %v524 = vcvt.s32.f32 %v458
    %v525 = vcvt.s32.f32 %v459
    %v526 = vcvt.s32.f32 %v460
    %v527 = vcvt.s32.f32 %v461
    %v528 = vcvt.s32.f32 %v462
    %v529 = vcvt.s32.f32 %v463
    %v530 = vcvt.s32.f32 %v464
    %v531 = vcvt.s32.f32 %v465
    %v532 = vcvt.s32.f32 %v466
    %v533 = vcvt.s32.f32 %v467
    %v534 = vcvt.s32.f32 %v468
    %v535 = vcvt.s32.f32 %v469
    %v536 = vcvt.s32.f32 %v470
    %v537 = vcvt.s32.f32 %v471
    %v538 = vcvt.s32.f32 %v472
    %v539 = vcvt.s32.f32 %v473
    %v540 = vcvt.s32.f32 %v474
    %v541 = vcvt.s32.f32 %v475
    %v542 = vcvt.s32.f32 %v476
    %v543 = vcvt.s32.f32 %v477
    %v544 = vcvt.s32.f32 %v478
    %v545 = vcvt.s32.f32 %v479
    %v546 = vcvt.s32.f32 %v480
    %v547 = vcvt.s32.f32 %v481
    %vm548 = vcmask 130048
    %v550 = vsel %vm548, %v149, 0
    %552 = vmatpush.msra.mxu0 %v497
    %553 = vmatpush.msra.mxu0 %v496
    %554 = vmatpush.msra.mxu0 %v495
    %555 = vmatpush.msra.mxu0 %v494
    %556 = vmatpush.msra.mxu0 %v493
    %557 = vmatpush.msra.mxu0 %v492
    %558 = vmatpush.msra.mxu0 %v491
    %559 = vmatpush.msra.mxu0 %v490
    %560 = vmatpush.msra.mxu0 %v489
    %561 = vmatpush.msra.mxu0 %v488
    %562 = vmatpush.msra.mxu0 %v487
    %563 = vmatpush.msra.mxu0 %v486
    %564 = vmatpush.msra.mxu0 %v485
    %565 = vmatpush.msra.mxu0 %v484
    %566 = vmatpush.msra.mxu0 %v483
    %567 = vmatpush.msra.mxu0 %v482
    %568 = vmatmul.f32.gmra.mxu0 %v69
    %v569 = vpop.f32.mrf.mxu0
    %v570 = vadd.f32 0.0, %v569
    %571 = vdwg.mxu0
    %572 = vmatpush.msra.mxu0 %v513
    %573 = vmatpush.msra.mxu0 %v512
    %574 = vmatpush.msra.mxu0 %v511
    %575 = vmatpush.msra.mxu0 %v510
    %576 = vmatpush.msra.mxu0 %v509
    %577 = vmatpush.msra.mxu0 %v508
    %578 = vmatpush.msra.mxu0 %v507
    %579 = vmatpush.msra.mxu0 %v506
    %580 = vmatpush.msra.mxu0 %v505
    %581 = vmatpush.msra.mxu0 %v504
    %582 = vmatpush.msra.mxu0 %v503
    %583 = vmatpush.msra.mxu0 %v502
    %584 = vmatpush.msra.mxu0 %v501
    %585 = vmatpush.msra.mxu0 %v500
    %586 = vmatpush.msra.mxu0 %v499
    %587 = vmatpush.msra.mxu0 %v498
    %588 = vmatmul.f32.gmra.mxu0 %v89
    %v589 = vpop.f32.mrf.mxu0
    %v590 = vadd.f32 %v570, %v589
    %591 = vdwg.mxu0
    %592 = vmatpush.msra.mxu0 %v529
    %593 = vmatpush.msra.mxu0 %v528
    %594 = vmatpush.msra.mxu0 %v527
    %595 = vmatpush.msra.mxu0 %v526
    %596 = vmatpush.msra.mxu0 %v525
    %597 = vmatpush.msra.mxu0 %v524
    %598 = vmatpush.msra.mxu0 %v523
    %599 = vmatpush.msra.mxu0 %v522
    %600 = vmatpush.msra.mxu0 %v521
    %601 = vmatpush.msra.mxu0 %v520
    %602 = vmatpush.msra.mxu0 %v519
    %603 = vmatpush.msra.mxu0 %v518
    %604 = vmatpush.msra.mxu0 %v517
    %605 = vmatpush.msra.mxu0 %v516
    %606 = vmatpush.msra.mxu0 %v515
    %607 = vmatpush.msra.mxu0 %v514
    %608 = vmatmul.f32.gmra.mxu0 %v109
    %v609 = vpop.f32.mrf.mxu0
    %v610 = vadd.f32 %v590, %v609
    %611 = vdwg.mxu0
    %612 = vmatpush.msra.mxu0 %v545
    %613 = vmatpush.msra.mxu0 %v544
    %614 = vmatpush.msra.mxu0 %v543
    %615 = vmatpush.msra.mxu0 %v542
    %616 = vmatpush.msra.mxu0 %v541
    %617 = vmatpush.msra.mxu0 %v540
    %618 = vmatpush.msra.mxu0 %v539
    %619 = vmatpush.msra.mxu0 %v538
    %620 = vmatpush.msra.mxu0 %v537
    %621 = vmatpush.msra.mxu0 %v536
    %622 = vmatpush.msra.mxu0 %v535
    %623 = vmatpush.msra.mxu0 %v534
    %624 = vmatpush.msra.mxu0 %v533
    %625 = vmatpush.msra.mxu0 %v532
    %626 = vmatpush.msra.mxu0 %v531
    %627 = vmatpush.msra.mxu0 %v530
    %628 = vmatmul.f32.gmra.mxu0 %v129
    %v629 = vpop.f32.mrf.mxu0
    %v630 = vadd.f32 %v610, %v629
    %631 = vdwg.mxu0
    %632 = vmatpush.msra.mxu0 0.0
    %633 = vmatpush.msra.mxu0 0.0
    %634 = vmatpush.msra.mxu0 0.0
    %635 = vmatpush.msra.mxu0 0.0
    %636 = vmatpush.msra.mxu0 0.0
    %637 = vmatpush.msra.mxu0 0.0
    %638 = vmatpush.msra.mxu0 0.0
    %639 = vmatpush.msra.mxu0 0.0
    %640 = vmatpush.msra.mxu0 0.0
    %641 = vmatpush.msra.mxu0 0.0
    %642 = vmatpush.msra.mxu0 0.0
    %643 = vmatpush.msra.mxu0 0.0
    %644 = vmatpush.msra.mxu0 0.0
    %645 = vmatpush.msra.mxu0 0.0
    %646 = vmatpush.msra.mxu0 %v547
    %647 = vmatpush.msra.mxu0 %v546
    %648 = vmatmul.f32.gmra.mxu0 %v550
    %v649 = vpop.f32.mrf.mxu0
    %v650 = vadd.f32 %v630, %v649
    %651 = vdwg.mxu0
    %v652 = vpack.c.bf16 %v650, %v650
    %v653 = vld [vmem:[%s1] sm:$0xff]
    %v654 = vld [vmem:[%s1 + $0x8] sm:$0xff]
    %v655 = vld [vmem:[%s1 + $0x10] sm:$0xff]
    %v656 = vld [vmem:[%s1 + $0x18] sm:$0xff]
    %v657 = vld [vmem:[%s1 + $0x20] sm:$0xff]
    %v658 = vld [vmem:[%s1 + $0x28] sm:$0xff]
    %v659 = vld [vmem:[%s1 + $0x30] sm:$0xff]
    %v660 = vld [vmem:[%s1 + $0x38] sm:$0xff]
    %v661 = vld [vmem:[%s1 + $0x40] sm:$0xff]
    %v662 = vld [vmem:[%s1 + $0x48] sm:$0xff]
    %v663 = vld [vmem:[%s1 + $0x50] sm:$0xff]
    %v664 = vld [vmem:[%s1 + $0x58] sm:$0xff]
    %v665 = vld [vmem:[%s1 + $0x60] sm:$0xff]
    %v666 = vld [vmem:[%s1 + $0x68] sm:$0xff]
    %v667 = vld [vmem:[%s1 + $0x70] sm:$0xff]
    %v668 = vld [vmem:[%s1 + $0x78] sm:$0xff]
    %v669 = vld [vmem:[%s1 + $0x80] sm:$0x11]
    %v670 = vld [vmem:[%s1 + $0x88] sm:$0x11]
    %v671 = vld [vmem:[%s1 + $0x90] sm:$0x11]
    %v672 = vld [vmem:[%s1 + $0x98] sm:$0x11]
    %v673 = vld [vmem:[%s2] sm:$0xff]
    %v675 = vperm.slane %v673, 0
    %v676 = vperm.slane %v673, 1
    %v677 = vperm.slane %v673, 2
    %v678 = vperm.slane %v673, 3
    %v679 = vperm.slane %v673, 4
    %v680 = vperm.slane %v673, 5
    %v681 = vperm.slane %v673, 6
    %v682 = vperm.slane %v673, 7
    %v711 = vunpack.c.l.b16 %v653
    %v712 = vunpack.c.h.b16 %v653
    %v713 = vunpack.c.l.b16 %v654
    %v714 = vunpack.c.h.b16 %v654
    %v715 = vunpack.c.l.b16 %v655
    %v716 = vunpack.c.h.b16 %v655
    %v717 = vunpack.c.l.b16 %v656
    %v718 = vunpack.c.h.b16 %v656
    %v719 = vunpack.c.l.b16 %v657
    %v720 = vunpack.c.h.b16 %v657
    %v721 = vunpack.c.l.b16 %v658
    %v722 = vunpack.c.h.b16 %v658
    %v723 = vunpack.c.l.b16 %v659
    %v724 = vunpack.c.h.b16 %v659
    %v725 = vunpack.c.l.b16 %v660
    %v726 = vunpack.c.h.b16 %v660
    %v727 = vunpack.c.l.b16 %v661
    %v728 = vunpack.c.h.b16 %v661
    %v729 = vunpack.c.l.b16 %v662
    %v730 = vunpack.c.h.b16 %v662
    %v731 = vunpack.c.l.b16 %v663
    %v732 = vunpack.c.h.b16 %v663
    %v733 = vunpack.c.l.b16 %v664
    %v734 = vunpack.c.h.b16 %v664
    %v735 = vunpack.c.l.b16 %v665
    %v736 = vunpack.c.h.b16 %v665
    %v737 = vunpack.c.l.b16 %v666
    %v738 = vunpack.c.h.b16 %v666
    %v739 = vunpack.c.l.b16 %v667
    %v740 = vunpack.c.h.b16 %v667
    %v741 = vunpack.c.l.b16 %v668
    %v742 = vunpack.c.h.b16 %v668
    %v743 = vunpack.c.l.b16 %v669
    %v744 = vunpack.c.h.b16 %v669
    %v745 = vunpack.c.l.b16 %v670
    %v746 = vunpack.c.h.b16 %v670
    %v747 = vunpack.c.l.b16 %v671
    %v748 = vunpack.c.h.b16 %v671
    %v749 = vunpack.c.l.b16 %v672
    %v750 = vunpack.c.h.b16 %v672
    %v751 = vpack.c.b16 %v719, %v711
    %v752 = vpack.c.b16 %v720, %v712
    %v753 = vpack.c.b16 %v721, %v713
    %v754 = vpack.c.b16 %v722, %v714
    %v755 = vpack.c.b16 %v723, %v715
    %v756 = vpack.c.b16 %v724, %v716
    %v757 = vpack.c.b16 %v725, %v717
    %v758 = vpack.c.b16 %v726, %v718
    %v759 = vpack.c.b16 %v735, %v727
    %v760 = vpack.c.b16 %v736, %v728
    %v761 = vpack.c.b16 %v737, %v729
    %v762 = vpack.c.b16 %v738, %v730
    %v763 = vpack.c.b16 %v739, %v731
    %v764 = vpack.c.b16 %v740, %v732
    %v765 = vpack.c.b16 %v741, %v733
    %v766 = vpack.c.b16 %v742, %v734
    %v767 = vpack.c.b16 %v743, %v743
    %v768 = vpack.c.b16 %v744, %v744
    %v769 = vpack.c.b16 %v745, %v745
    %v770 = vpack.c.b16 %v746, %v746
    %v771 = vpack.c.b16 %v747, %v747
    %v772 = vpack.c.b16 %v748, %v748
    %v773 = vpack.c.b16 %v749, %v749
    %v774 = vpack.c.b16 %v750, %v750
    %vm791 = vcmask 269312
    %v793 = vsel %vm791, %v652, 0
    %vm795 = vcmask 1040384
    %v796 = vsel 0, 4294967295, 65535
    %v797 = vsel %vm795, %v796, 0
    %v799 = vand.u32 %v767, %v797
    %v802 = vand.u32 %v768, %v797
    %v805 = vand.u32 %v769, %v797
    %v808 = vand.u32 %v770, %v797
    %v811 = vand.u32 %v771, %v797
    %v814 = vand.u32 %v772, %v797
    %v817 = vand.u32 %v773, %v797
    %v820 = vand.u32 %v774, %v797
    %822 = vmatpush.bf16.msra.mxu0 0
    %823 = vmatpush.bf16.msra.mxu0 0
    %824 = vmatpush.bf16.msra.mxu0 0
    %825 = vmatpush.bf16.msra.mxu0 0
    %826 = vmatpush.bf16.msra.mxu0 0
    %827 = vmatpush.bf16.msra.mxu0 %v799
    %828 = vmatpush.bf16.msra.mxu0 %v759
    %829 = vmatpush.bf16.msra.mxu0 %v751
    %830 = vmatmul.bf16.gmra.mxu0 %v793
    %v831 = vpop.f32.mrf.mxu0
    %v832 = vadd.f32 %v675, %v831
    %v833 = vpop.f32.mrf.mxu0
    %834 = vdwg.mxu0
    %835 = vmatpush.bf16.msra.mxu0 0
    %836 = vmatpush.bf16.msra.mxu0 0
    %837 = vmatpush.bf16.msra.mxu0 0
    %838 = vmatpush.bf16.msra.mxu0 0
    %839 = vmatpush.bf16.msra.mxu0 0
    %840 = vmatpush.bf16.msra.mxu0 %v802
    %841 = vmatpush.bf16.msra.mxu0 %v760
    %842 = vmatpush.bf16.msra.mxu0 %v752
    %843 = vmatmul.bf16.gmra.mxu0 %v793
    %v844 = vpop.f32.mrf.mxu0
    %v845 = vadd.f32 %v676, %v844
    %v846 = vpop.f32.mrf.mxu0
    %847 = vdwg.mxu0
    %848 = vmatpush.bf16.msra.mxu0 0
    %849 = vmatpush.bf16.msra.mxu0 0
    %850 = vmatpush.bf16.msra.mxu0 0
    %851 = vmatpush.bf16.msra.mxu0 0
    %852 = vmatpush.bf16.msra.mxu0 0
    %853 = vmatpush.bf16.msra.mxu0 %v805
    %854 = vmatpush.bf16.msra.mxu0 %v761
    %855 = vmatpush.bf16.msra.mxu0 %v753
    %856 = vmatmul.bf16.gmra.mxu0 %v793
    %v857 = vpop.f32.mrf.mxu0
    %v858 = vadd.f32 %v677, %v857
    %v859 = vpop.f32.mrf.mxu0
    %860 = vdwg.mxu0
    %861 = vmatpush.bf16.msra.mxu0 0
    %862 = vmatpush.bf16.msra.mxu0 0
    %863 = vmatpush.bf16.msra.mxu0 0
    %864 = vmatpush.bf16.msra.mxu0 0
    %865 = vmatpush.bf16.msra.mxu0 0
    %866 = vmatpush.bf16.msra.mxu0 %v808
    %867 = vmatpush.bf16.msra.mxu0 %v762
    %868 = vmatpush.bf16.msra.mxu0 %v754
    %869 = vmatmul.bf16.gmra.mxu0 %v793
    %v870 = vpop.f32.mrf.mxu0
    %v871 = vadd.f32 %v678, %v870
    %v872 = vpop.f32.mrf.mxu0
    %873 = vdwg.mxu0
    %874 = vmatpush.bf16.msra.mxu0 0
    %875 = vmatpush.bf16.msra.mxu0 0
    %876 = vmatpush.bf16.msra.mxu0 0
    %877 = vmatpush.bf16.msra.mxu0 0
    %878 = vmatpush.bf16.msra.mxu0 0
    %879 = vmatpush.bf16.msra.mxu0 %v811
    %880 = vmatpush.bf16.msra.mxu0 %v763
    %881 = vmatpush.bf16.msra.mxu0 %v755
    %882 = vmatmul.bf16.gmra.mxu0 %v793
    %v883 = vpop.f32.mrf.mxu0
    %v884 = vadd.f32 %v679, %v883
    %v885 = vpop.f32.mrf.mxu0
    %886 = vdwg.mxu0
    %887 = vmatpush.bf16.msra.mxu0 0
    %888 = vmatpush.bf16.msra.mxu0 0
    %889 = vmatpush.bf16.msra.mxu0 0
    %890 = vmatpush.bf16.msra.mxu0 0
    %891 = vmatpush.bf16.msra.mxu0 0
    %892 = vmatpush.bf16.msra.mxu0 %v814
    %893 = vmatpush.bf16.msra.mxu0 %v764
    %894 = vmatpush.bf16.msra.mxu0 %v756
    %895 = vmatmul.bf16.gmra.mxu0 %v793
    %v896 = vpop.f32.mrf.mxu0
    %v897 = vadd.f32 %v680, %v896
    %v898 = vpop.f32.mrf.mxu0
    %899 = vdwg.mxu0
    %900 = vmatpush.bf16.msra.mxu0 0
    %901 = vmatpush.bf16.msra.mxu0 0
    %902 = vmatpush.bf16.msra.mxu0 0
    %903 = vmatpush.bf16.msra.mxu0 0
    %904 = vmatpush.bf16.msra.mxu0 0
    %905 = vmatpush.bf16.msra.mxu0 %v817
    %906 = vmatpush.bf16.msra.mxu0 %v765
    %907 = vmatpush.bf16.msra.mxu0 %v757
    %908 = vmatmul.bf16.gmra.mxu0 %v793
    %v909 = vpop.f32.mrf.mxu0
    %v910 = vadd.f32 %v681, %v909
    %v911 = vpop.f32.mrf.mxu0
    %912 = vdwg.mxu0
    %913 = vmatpush.bf16.msra.mxu0 0
    %914 = vmatpush.bf16.msra.mxu0 0
    %915 = vmatpush.bf16.msra.mxu0 0
    %916 = vmatpush.bf16.msra.mxu0 0
    %917 = vmatpush.bf16.msra.mxu0 0
    %918 = vmatpush.bf16.msra.mxu0 %v820
    %919 = vmatpush.bf16.msra.mxu0 %v766
    %920 = vmatpush.bf16.msra.mxu0 %v758
    %921 = vmatmul.bf16.gmra.mxu0 %v793
    %v922 = vpop.f32.mrf.mxu0
    %v923 = vadd.f32 %v682, %v922
    %v924 = vpop.f32.mrf.mxu0
    %925 = vdwg.mxu0
    %vm926 = vcmp.ge.s32.totalorder %v37, 0
    %vm927 = vcmp.lt.s32.totalorder %v37, 14
    %vm928 = vmand %vm926, %vm927
    %v929 = vsel %vm928, %v832, -1e+30
    %vm930 = vcmask 1041408
    %v931 = vsel %vm930, %v929, -inf
    %932 = vmax.xlane.f32.xlu0 %v931
    %v933 = vpop.xlane.xlu0 %932
    %v934 = vsub.f32 %v929, %v933
    %v935 = vmul.f32 %v934, 1.442695
    %v936 = vpow.pop %v935
    %v937 = vsel %vm928, %v936, 0.0
    %v938 = vsel %vm930, %v937, 0.0
    %939 = vadd.xlane.f32.xlu0 %v938
    %v940 = vpop.xlane.xlu0 %939
    %v941 = vrcp.pop %v940
    %v942 = vmul.f32 %v937, %v941
    %v943 = vsel %vm928, %v942, %v832
    %vm944 = vcmp.ge.s32.totalorder %v37, 15
    %vm945 = vcmp.lt.s32.totalorder %v37, 20
    %vm946 = vmand %vm944, %vm945
    %v947 = vxor.u32 %v832, 2147483648
    %v948 = vmul.f32 %v947, 1.442695
    %v949 = vpow.pop %v948
    %v950 = vadd.f32 %v949, 1.0
    %v951 = vrcp.pop %v950
    %v952 = vmul.f32 %v950, %v951
    %v953 = vsub.f32 1.0, %v952
    %v954 = vmul.f32 %v951, %v953
    %v955 = vadd.f32 %v951, %v954
    %vm956 = vweird.f32 %v950
    %vm957 = vweird.f32 %v951
    %vm958 = vmor %vm956, %vm957
    %v959 = vsel %vm958, %v951, %v955
    %v960 = vand.u32 2147483647, %v950
    %vm961 = vcmp.eq.f32.partialorder %v960, 8.507059e+37
    %v962 = vand.u32 %v950, 2147483648
    %v963 = vor.u32 1.1754944e-38, %v962
    %v964 = vsel %vm961, %v963, %v959
    %v965 = vmul.f32 1.0, %v964
    %v966 = vsel %vm946, %v965, %v943
    %vm967 = vcmp.ge.s32.totalorder %v37, 21
    %vm968 = vcmp.lt.s32.totalorder %v37, 26
    %vm969 = vmand %vm967, %vm968
    %v970 = vmax.f32 %v832, 0.0
    %v971 = vsel %vm969, %v970, %v966
    %vm972 = vcmp.ge.s32.totalorder %v37, 27
    %vm973 = vcmp.lt.s32.totalorder %v37, 38
    %vm974 = vmand %vm972, %vm973
    %v975 = vsel %vm974, %v832, -1e+30
    %v976 = vsel %vm930, %v975, -inf
    %977 = vmax.xlane.f32.xlu0 %v976
    %v978 = vpop.xlane.xlu0 %977
    %v979 = vsub.f32 %v975, %v978
    %v980 = vmul.f32 %v979, 1.442695
    %v981 = vpow.pop %v980
    %v982 = vsel %vm974, %v981, 0.0
    %v983 = vsel %vm930, %v982, 0.0
    %984 = vadd.xlane.f32.xlu0 %v983
    %v985 = vpop.xlane.xlu0 %984
    %v986 = vrcp.pop %v985
    %v987 = vmul.f32 %v982, %v986
    %v988 = vsel %vm974, %v987, %v971
    %989 = vst [vmem:[#allocation2] sm:$0x3] %v988
    %v997 = vrot.slane %v858, 6
    %v998 = vrot.slane %v871, 4
    %v999 = vrot.slane %v884, 2
    %v1000 = vrot.slane %v910, 6
    %v1001 = vrot.slane %v923, 4
    %v1002 = vsel %vm930, %v845, %v997
    %vm1003 = vcmask 1045508
    %v1004 = vsel %vm1003, %v998, %v999
    %vm1005 = vcmask 1043456
    %v1006 = vsel %vm1005, %v1002, %v1004
    %v1007 = vsel %vm930, %v897, %v1000
    %v1008 = vsel %vm1005, %v1007, %v1001
    %1011 = vst [vmem:[#allocation2 + $0x2] sm:$0xff] %v1006
    %vm1012 = vcmask 1043458
    %vm1013 = vmor %vm1012, %vm930
    %vm1014 = vcmask 848900
    %vm1015 = vmor %vm1014, %vm1013
    %1016 = vst.msk [vmem:[#allocation2 + $0xa] sm:$0x3f] %vm1015, %v1008
    // Predicated region
    $region14: #{module_forward.1} parent=1 // pred_check
      _
    $region15: #{module_forward.1} parent=1 // pred_check_branch
      %1018 = sbr.rel (0) target = $region17
    $region16: #{module_forward.1} parent=1 // pred_region
      %1020 = vsyncadd [#allocation3], 0
      %s1022 = sshll.u32 [#allocation2], 4
      %s1023 = int_to_ptr.vmem [resolvable:$true] %s1022
      %s1024 = sshll.u32 %s3, 4
      %s1025 = int_to_ptr.hbm [resolvable:$true] %s1024
      %1027 = dma.vmem_to_hbm [thread:$0]  %s1023, 256, %s1025, [#allocation3]
    $region17: #{module_forward.1} parent=1 // pred_fallthru
      _
    // Predicated region
    $region18: #{module_forward.1} parent=1 // pred_check
      _
    $region19: #{module_forward.1} parent=1 // pred_check_branch
      %1029 = sbr.rel (0) target = $region21
    $region20: #{module_forward.1} parent=1 // pred_region
      %1031 = dma.done [#allocation3], 256
    $region21: #{module_forward.1} parent=1 // pred_fallthru
      _
    %1032 = vsyncpa [#allocation3], 1

</llo_original>
